<compile_context>
chip_gen: v7x
topology: tpu7x:2x2x1
jax: 0.10.0
libtpu: 0.0.40
codegen_flags: <defaults>
</compile_context>

<pallas_src>
import functools

import jax
import jax.numpy as jnp
from jax.experimental import pallas as pl
from jax.experimental.pallas import tpu as pltpu


def _round_up(x, m):
    return ((x + m - 1) // m) * m


def _make_kernel(layer_meta, head_meta, latent_dim):
    """Fused encoder kernel. Static over layer_meta / head_meta / latent_dim.

    layer_meta: tuple of (row_offset, in_size, out_size) into the param slab.
    head_meta:  (row_offset, in_size, 3*latent_dim) for the fused heads.
    """
    L = latent_dim

    def kernel(xeps_ref, p_ref, latent_ref, z_ref, mu_ref, sigma_ref):
        P = p_ref[...]                      # (slab_rows, Cmax), VMEM-resident
        x = xeps_ref[:, 0:1]                # (TB, 1)
        eps = xeps_ref[:, 1:1 + L]          # (TB, L)

        h = x
        for (off, K, H) in layer_meta:
            if K == 1:
                # First Linear has in_features == 1: pure VPU broadcast.
                w = P[off:off + 1, :H]
                b = P[off + 1:off + 2, :H]
                h = jnp.maximum(x * w + b, 0.0)
            else:
                w = P[off:off + K, :H]
                b = P[off + K:off + K + 1, :H]
                h = jnp.maximum(
                    jnp.dot(h, w, preferred_element_type=jnp.float32) + b, 0.0)

        # Fused heads: one matmul for [latent | mu | logsigma].
        off, K, H3 = head_meta
        wh = P[off:off + K, :H3]
        bh = P[off + K:off + K + 1, :H3]
        if K == 1:
            heads = h * wh + bh             # degenerate no-hidden case
        else:
            heads = jnp.dot(h, wh, preferred_element_type=jnp.float32) + bh

        mu = heads[:, L:2 * L]
        sigma = jnp.exp(heads[:, 2 * L:3 * L])
        latent_ref[...] = heads[:, 0:L]
        mu_ref[...] = mu
        sigma_ref[...] = sigma
        z_ref[...] = mu + sigma * eps

    return kernel


def init_params(key, hidden_sizes, latent_dim):
    """nn.Linear-style init (U[-1/sqrt(fan_in), 1/sqrt(fan_in)]).
    Weights stored as (in_features, out_features)."""
    params = {"hidden": []}
    in_size = 1
    for hs in hidden_sizes:
        key, kw, kb = jax.random.split(key, 3)
        bound = 1.0 / jnp.sqrt(jnp.float32(in_size))
        w = jax.random.uniform(kw, (in_size, hs), jnp.float32, -bound, bound)
        b = jax.random.uniform(kb, (1, hs), jnp.float32, -bound, bound)
        params["hidden"].append((w, b))
        in_size = hs
    for name in ("latent_out", "fc_mu", "fc_logsigma"):
        key, kw, kb = jax.random.split(key, 3)
        bound = 1.0 / jnp.sqrt(jnp.float32(in_size))
        w = jax.random.uniform(kw, (in_size, latent_dim), jnp.float32, -bound, bound)
        b = jax.random.uniform(kb, (1, latent_dim), jnp.float32, -bound, bound)
        params[name] = (w, b)
    return params


@functools.partial(jax.jit, static_argnames=("latent_dim", "block_batch"))
def discrete_encoder_forward(obs, params, eps, *, latent_dim, block_batch=None):
    """obs: scalar, (B,) or (B,1) observations; eps: (B, latent_dim) noise."""
    L = latent_dim
    x = jnp.asarray(obs, jnp.float32)
    if x.ndim == 0:
        x = x.reshape(1, 1)
    elif x.ndim == 1:
        x = x.reshape(-1, 1)
    B = x.shape[0]

    hidden_sizes = tuple(w.shape[1] for (w, _) in params["hidden"])
    Cmax = max(hidden_sizes + (3 * L,))

    # ---- single parameter slab: per-layer regions 8-row aligned -------------
    def pack(w, b):
        K, H = w.shape
        rows = _round_up(K + 1, 8)
        blk = jnp.zeros((rows, Cmax), jnp.float32)
        blk = blk.at[:K, :H].set(w.astype(jnp.float32))
        blk = blk.at[K, :H].set(jnp.reshape(b, (-1,)).astype(jnp.float32))
        return blk

    blocks = []
    layer_meta = []
    off = 0
    in_size = 1
    for (w, b) in params["hidden"]:
        K, H = w.shape
        blocks.append(pack(w, b))
        layer_meta.append((off, K, H))
        off += blocks[-1].shape[0]
        in_size = H
    w_lat, b_lat = params["latent_out"]
    w_mu, b_mu = params["fc_mu"]
    w_ls, b_ls = params["fc_logsigma"]
    w_head = jnp.concatenate([w_lat, w_mu, w_ls], axis=1)
    b_head = jnp.concatenate([jnp.reshape(b_lat, (1, -1)),
                              jnp.reshape(b_mu, (1, -1)),
                              jnp.reshape(b_ls, (1, -1))], axis=1)
    blocks.append(pack(w_head, b_head))
    head_meta = (off, in_size, 3 * L)
    slab = jnp.concatenate(blocks, axis=0)              # (slab_rows, Cmax)

    # ---- single merged row operand [x | eps] ---------------------------------
    xeps = jnp.concatenate([x, eps.astype(jnp.float32)], axis=1)   # (B, L+1)

    # ---- batch tiling: cdiv grid, no padding ---------------------------------
    B8 = _round_up(max(B, 1), 8)
    if block_batch is None:
        TB = 4096                                       # VMEM-budget-aware cap
        if B8 >= 16:
            # ensure >=2 grid steps so "parallel" shards across v7x's 2 TCs
            TB = min(TB, _round_up(pl.cdiv(B8, 2), 8))
    else:
        TB = _round_up(int(block_batch), 8)
    TB = max(8, min(TB, B8))
    grid = (pl.cdiv(B, TB),)

    kernel = _make_kernel(tuple(layer_meta), head_meta, L)

    in_specs = [
        pl.BlockSpec((TB, L + 1), lambda i: (i, 0)),    # [x | eps] row tile
        pl.BlockSpec(slab.shape, lambda i: (0, 0)),     # params, VMEM-resident
    ]
    out_spec = pl.BlockSpec((TB, L), lambda i: (i, 0))
    out_shape = tuple(jax.ShapeDtypeStruct((B, L), jnp.float32) for _ in range(4))

    # ---- advisory cost estimate ----------------------------------------------
    mac = 0
    k = 1
    for hs in hidden_sizes:
        mac += k * hs
        k = hs
    mac += k * 3 * L
    cost = pl.CostEstimate(
        flops=2 * B * mac + 5 * B * L,
        transcendentals=B * L,
        bytes_accessed=4 * (int(slab.size) + B * (L + 1) + B * 4 * L),
    )

    # ---- VMEM budget (lane-padded row tiles, double-buffered) ----------------
    lane = 128
    est_vmem = (1 + 4) * 2 * TB * lane * 4              # xeps + 4 outputs
    est_vmem += 2 * slab.shape[0] * lane * 4            # param slab
    est_vmem += 6 * TB * max(Cmax, lane) * 4            # intermediates headroom
    vmem_limit = int(min(56 << 20, max(est_vmem, 16 << 20)))

    latent_obs, z, mu, sigma = pl.pallas_call(
        kernel,
        out_shape=out_shape,
        grid=grid,
        in_specs=in_specs,
        out_specs=(out_spec, out_spec, out_spec, out_spec),
        compiler_params=pltpu.CompilerParams(
            dimension_semantics=("parallel",),
            vmem_limit_bytes=vmem_limit),
        cost_estimate=cost,
    )(xeps, slab)

    # dist (Normal) is returned by its parameters.
    return latent_obs, z, (mu, sigma)


def reference_forward(obs, params, eps):
    """Pure-JAX reference for correctness checking."""
    x = jnp.asarray(obs, jnp.float32).reshape(-1, 1)
    h = x
    for (w, b) in params["hidden"]:
        h = jnp.maximum(h @ w + b, 0.0)
    w, b = params["latent_out"]
    latent_obs = h @ w + b
    w, b = params["fc_mu"]
    mu = h @ w + b
    w, b = params["fc_logsigma"]
    logsigma = h @ w + b
    sigma = jnp.exp(logsigma)
    z = mu + sigma * eps
    return latent_obs, z, (mu, sigma)


def _check(got, ref):
    for g, r in zip(got, ref):
        assert jnp.allclose(g, r, atol=1e-4, rtol=1e-4), (g, r)


if __name__ == "__main__":
    hidden_sizes = [32, 32]
    latent_dim = 8

    key = jax.random.PRNGKey(0)
    k_params, k_obs, k_eps, k_obs2, k_eps2 = jax.random.split(key, 5)

    params = init_params(k_params, hidden_sizes, latent_dim)

    # --- case 1: small batch, single grid step -------------------------------
    B = 8
    obs = jax.random.randint(k_obs, (B,), 0, 10).astype(jnp.float32)
    eps = jax.random.normal(k_eps, (B, latent_dim), jnp.float32)
    latent_obs, z, (mu, sigma) = discrete_encoder_forward(
        obs, params, eps, latent_dim=latent_dim)
    jax.block_until_ready((latent_obs, z, mu, sigma))
    r_lat, r_z, (r_mu, r_sig) = reference_forward(obs, params, eps)
    _check((latent_obs, z, mu, sigma), (r_lat, r_z, r_mu, r_sig))

    # --- case 2: ragged batch, multi-step grid + masked partial last block ---
    B2 = 20
    obs2 = jax.random.randint(k_obs2, (B2,), 0, 10).astype(jnp.float32)
    eps2 = jax.random.normal(k_eps2, (B2, latent_dim), jnp.float32)
    latent2, z2, (mu2, sig2) = discrete_encoder_forward(
        obs2, params, eps2, latent_dim=latent_dim, block_batch=8)
    jax.block_until_ready((latent2, z2, mu2, sig2))
    r_lat2, r_z2, (r_mu2, r_sig2) = reference_forward(obs2, params, eps2)
    _check((latent2, z2, mu2, sig2), (r_lat2, r_z2, r_mu2, r_sig2))

    print("KERNEL_OK")
</pallas_src>

<mosaic_0001>
module attributes {stable_mosaic.version = 11 : i64} {
  func.func @kernel(%arg0: i32, %arg1: memref<8x9xf32, #tpu.memory_space<vmem>>, %arg2: memref<88x32xf32, #tpu.memory_space<vmem>>, %arg3: memref<8x8xf32, #tpu.memory_space<vmem>>, %arg4: memref<8x8xf32, #tpu.memory_space<vmem>>, %arg5: memref<8x8xf32, #tpu.memory_space<vmem>>, %arg6: memref<8x8xf32, #tpu.memory_space<vmem>>) attributes {dimension_semantics = [#tpu.dimension_semantics<parallel>], iteration_bounds = array<i64: 1>, scalar_prefetch = 0 : i64, scratch_operands = 0 : i64, tpu.core_type = #tpu.core_type<tc>, window_params = [{transform_indices = @transform_0, window_bounds = array<i64: 8, 9>}, {pipeline_mode = #tpu.pipeline_mode<synchronous>, transform_indices = @transform_1, window_bounds = array<i64: 88, 32>}, {transform_indices = @transform_2, window_bounds = array<i64: 8, 8>}, {transform_indices = @transform_3, window_bounds = array<i64: 8, 8>}, {transform_indices = @transform_4, window_bounds = array<i64: 8, 8>}, {transform_indices = @transform_5, window_bounds = array<i64: 8, 8>}]} {
    %c0 = arith.constant 0 : index
    %c0_0 = arith.constant 0 : index
    %0 = vector.load %arg2[%c0, %c0_0] : memref<88x32xf32, #tpu.memory_space<vmem>>, vector<88x32xf32>
    %c0_1 = arith.constant 0 : index
    %c0_2 = arith.constant 0 : index
    %1 = vector.load %arg1[%c0_1, %c0_2] : memref<8x9xf32, #tpu.memory_space<vmem>>, vector<8x1xf32>
    %c0_3 = arith.constant 0 : index
    %c1 = arith.constant 1 : index
    %2 = vector.load %arg1[%c0_3, %c1] : memref<8x9xf32, #tpu.memory_space<vmem>>, vector<8x8xf32>
    %3 = vector.extract_strided_slice %0 {offsets = [0, 0], sizes = [1, 32], strides = [1, 1]} : vector<88x32xf32> to vector<1x32xf32>
    %4 = vector.extract_strided_slice %0 {offsets = [1, 0], sizes = [1, 32], strides = [1, 1]} : vector<88x32xf32> to vector<1x32xf32>
    %5 = vector.broadcast %1 : vector<8x1xf32> to vector<8x32xf32>
    %6 = vector.broadcast %3 : vector<1x32xf32> to vector<8x32xf32>
    %7 = arith.mulf %5, %6 : vector<8x32xf32>
    %8 = vector.broadcast %4 : vector<1x32xf32> to vector<8x32xf32>
    %9 = arith.addf %7, %8 : vector<8x32xf32>
    %cst = arith.constant 0.000000e+00 : f32
    %10 = vector.broadcast %cst : f32 to vector<8x32xf32>
    %11 = arith.maximumf %9, %10 : vector<8x32xf32>
    %12 = vector.extract_strided_slice %0 {offsets = [8, 0], sizes = [32, 32], strides = [1, 1]} : vector<88x32xf32> to vector<32x32xf32>
    %13 = vector.extract_strided_slice %0 {offsets = [40, 0], sizes = [1, 32], strides = [1, 1]} : vector<88x32xf32> to vector<1x32xf32>
    %cst_4 = arith.constant dense<0.000000e+00> : vector<8x32xf32>
    %14 = tpu.matmul %11, %12, %cst_4 {dimension_numbers = #tpu.dot_dimension_numbers<[1], [0], [0], [1], [0, 0, 1, 1], [], []>} : vector<8x32xf32>, vector<32x32xf32>, vector<8x32xf32> -> vector<8x32xf32>
    %15 = vector.broadcast %13 : vector<1x32xf32> to vector<8x32xf32>
    %16 = arith.addf %14, %15 : vector<8x32xf32>
    %cst_5 = arith.constant 0.000000e+00 : f32
    %17 = vector.broadcast %cst_5 : f32 to vector<8x32xf32>
    %18 = arith.maximumf %16, %17 : vector<8x32xf32>
    %19 = vector.extract_strided_slice %0 {offsets = [48, 0], sizes = [32, 24], strides = [1, 1]} : vector<88x32xf32> to vector<32x24xf32>
    %20 = vector.extract_strided_slice %0 {offsets = [80, 0], sizes = [1, 24], strides = [1, 1]} : vector<88x32xf32> to vector<1x24xf32>
    %cst_6 = arith.constant dense<0.000000e+00> : vector<8x24xf32>
    %21 = tpu.matmul %18, %19, %cst_6 {dimension_numbers = #tpu.dot_dimension_numbers<[1], [0], [0], [1], [0, 0, 1, 1], [], []>} : vector<8x32xf32>, vector<32x24xf32>, vector<8x24xf32> -> vector<8x24xf32>
    %22 = vector.broadcast %20 : vector<1x24xf32> to vector<8x24xf32>
    %23 = arith.addf %21, %22 : vector<8x24xf32>
    %24 = vector.extract_strided_slice %23 {offsets = [0, 8], sizes = [8, 8], strides = [1, 1]} : vector<8x24xf32> to vector<8x8xf32>
    %25 = vector.extract_strided_slice %23 {offsets = [0, 16], sizes = [8, 8], strides = [1, 1]} : vector<8x24xf32> to vector<8x8xf32>
    %26 = math.exp %25 : vector<8x8xf32>
    %27 = vector.extract_strided_slice %23 {offsets = [0, 0], sizes = [8, 8], strides = [1, 1]} : vector<8x24xf32> to vector<8x8xf32>
    %c0_7 = arith.constant 0 : index
    %c0_8 = arith.constant 0 : index
    %28 = vector.load %arg3[%c0_7, %c0_8] : memref<8x8xf32, #tpu.memory_space<vmem>>, vector<8x8xf32>
    tpu.vector_store %arg3[%c0_7, %c0_8], %27 {strides = array<i32>} : memref<8x8xf32, #tpu.memory_space<vmem>>, vector<8x8xf32>,
    %c0_9 = arith.constant 0 : index
    %c0_10 = arith.constant 0 : index
    %29 = vector.load %arg5[%c0_9, %c0_10] : memref<8x8xf32, #tpu.memory_space<vmem>>, vector<8x8xf32>
    tpu.vector_store %arg5[%c0_9, %c0_10], %24 {strides = array<i32>} : memref<8x8xf32, #tpu.memory_space<vmem>>, vector<8x8xf32>,
    %c0_11 = arith.constant 0 : index
    %c0_12 = arith.constant 0 : index
    %30 = vector.load %arg6[%c0_11, %c0_12] : memref<8x8xf32, #tpu.memory_space<vmem>>, vector<8x8xf32>
    tpu.vector_store %arg6[%c0_11, %c0_12], %26 {strides = array<i32>} : memref<8x8xf32, #tpu.memory_space<vmem>>, vector<8x8xf32>,
    %31 = arith.mulf %26, %2 : vector<8x8xf32>
    %32 = arith.addf %24, %31 : vector<8x8xf32>
    %c0_13 = arith.constant 0 : index
    %c0_14 = arith.constant 0 : index
    %33 = vector.load %arg4[%c0_13, %c0_14] : memref<8x8xf32, #tpu.memory_space<vmem>>, vector<8x8xf32>
    tpu.vector_store %arg4[%c0_13, %c0_14], %32 {strides = array<i32>} : memref<8x8xf32, #tpu.memory_space<vmem>>, vector<8x8xf32>,
    return
  }
  func.func @transform_0(%arg0: i32) -> (i32, i32) {
    %c0_i32 = arith.constant 0 : i32
    %c0_i32_0 = arith.constant 0 : i32
    return %arg0, %c0_i32 : i32, i32
  }
  func.func @transform_1(%arg0: i32) -> (i32, i32) {
    %c0_i32 = arith.constant 0 : i32
    %c0_i32_0 = arith.constant 0 : i32
    %c0_i32_1 = arith.constant 0 : i32
    return %c0_i32, %c0_i32_0 : i32, i32
  }
  func.func @transform_2(%arg0: i32) -> (i32, i32) {
    %c0_i32 = arith.constant 0 : i32
    %c0_i32_0 = arith.constant 0 : i32
    return %arg0, %c0_i32 : i32, i32
  }
  func.func @transform_3(%arg0: i32) -> (i32, i32) {
    %c0_i32 = arith.constant 0 : i32
    %c0_i32_0 = arith.constant 0 : i32
    return %arg0, %c0_i32 : i32, i32
  }
  func.func @transform_4(%arg0: i32) -> (i32, i32) {
    %c0_i32 = arith.constant 0 : i32
    %c0_i32_0 = arith.constant 0 : i32
    return %arg0, %c0_i32 : i32, i32
  }
  func.func @transform_5(%arg0: i32) -> (i32, i32) {
    %c0_i32 = arith.constant 0 : i32
    %c0_i32_0 = arith.constant 0 : i32
    return %arg0, %c0_i32 : i32, i32
  }
}

</mosaic_0001>

<llo_original>
// kernel: discrete_encoder_forward.1
$region0: #{discrete_encoder_forward.1}
  #allocation0 [shape = 'u32[]', space=smem, size = 0x4, offset = 0x4, fixed_abs, tag = 'smem constant byte address 0x4 - core index']
  #allocation1 [shape = 'u32[144,128]{1,0:T(1,128)}', space=vmem, size = 0x12000, scoped, tag = 'internal scratch']
  %s0 = inlined_call_operand.vmem [shape: f32[8,9], index: 0, kind: input, shape index: {}]
  %s1 = inlined_call_operand.vmem [shape: f32[88,32], index: 1, kind: input, shape index: {}]
  %s2 = inlined_call_operand.hbm [shape: f32[8,8], index: 2, kind: output, shape index: {0}]
  %s3 = inlined_call_operand.hbm [shape: f32[8,8], index: 3, kind: output, shape index: {1}]
  %s4 = inlined_call_operand.hbm [shape: f32[8,8], index: 4, kind: output, shape index: {2}]
  %s5 = inlined_call_operand.hbm [shape: f32[8,8], index: 5, kind: output, shape index: {3}]
  %6 = xla_tuple %s2, %s3, %s4, %s5
  %s7 = sld [smem:[#allocation0]]
  $region42: #{discrete_encoder_forward.1} parent=0
    _
  %s9 = ssub.s32 1, %s7
  %s10 = scalar_select 0, %s9, %s7
  $region1: #{discrete_encoder_forward.1} parent=0
    #allocation2 [shape = 'u8[4096]{0}', space=vmem, size = 0x1000, scoped, tag = 'output window, operand 0, single buffered']
    #allocation3 [shape = 's32[1]{0}', space=sflag, size = 0x4, scoped, tag = 'scoped memory for discrete_encoder_forward.1']
    #allocation4 [shape = 'u8[4096]{0}', space=vmem, size = 0x1000, scoped, tag = 'output window, operand 1, single buffered']
    #allocation5 [shape = 's32[1]{0}', space=sflag, size = 0x4, scoped, tag = 'scoped memory for discrete_encoder_forward.1']
    #allocation6 [shape = 'u8[4096]{0}', space=vmem, size = 0x1000, scoped, tag = 'output window, operand 2, single buffered']
    #allocation7 [shape = 'u8[4096]{0}', space=vmem, size = 0x1000, scoped, tag = 'output window, operand 3, single buffered']
    #allocation8 [shape = 's32[1]{0}', space=sflag, size = 0x4, scoped, tag = 'scoped memory for discrete_encoder_forward.1']
    %11 = vsyncpa [#allocation3], 0
    %12 = vsyncpa [#allocation5], 0
    %13 = vsyncpa [#allocation8], 0
    // Predicated region
    $region2: #{discrete_encoder_forward.1} parent=1 // pred_check
      _
    $region3: #{discrete_encoder_forward.1} parent=1 // pred_check_branch
      %15 = sbr.rel (0) target = $region5
    $region4: #{discrete_encoder_forward.1} parent=1 // pred_region
      _
    $region5: #{discrete_encoder_forward.1} parent=1 // pred_fallthru
      _
    // Predicated region
    $region6: #{discrete_encoder_forward.1} parent=1 // pred_check
      _
    $region7: #{discrete_encoder_forward.1} parent=1 // pred_check_branch
      %17 = sbr.rel (0) target = $region9
    $region8: #{discrete_encoder_forward.1} parent=1 // pred_region
      _
    $region9: #{discrete_encoder_forward.1} parent=1 // pred_fallthru
      _
    %v18 = vld [vmem:[%s1] sm:$0xff]
    %v19 = vld [vmem:[%s1 + $0x8] sm:$0xff]
    %v20 = vld [vmem:[%s1 + $0x10] sm:$0xff]
    %v21 = vld [vmem:[%s1 + $0x18] sm:$0xff]
    %v22 = vld [vmem:[%s1 + $0x20] sm:$0xff]
    %v23 = vld [vmem:[%s1 + $0x28] sm:$0xff]
    %v24 = vld [vmem:[%s1 + $0x30] sm:$0xff]
    %v25 = vld [vmem:[%s1 + $0x38] sm:$0xff]
    %v26 = vld [vmem:[%s1 + $0x40] sm:$0xff]
    %v27 = vld [vmem:[%s1 + $0x48] sm:$0xff]
    %v28 = vld [vmem:[%s1 + $0x50] sm:$0xff]
    %v29 = vld [vmem:[%s0] sm:$0xff]
    %31 = vset.pattern.permute.xlu0 0
    %32 = vperm.xlu0 %31, %v29
    %v33 = vpop.permute.xlu0 %32
    %v35 = vlaneseq
    %v36 = vshrl.u32 %v35, 7
    %v37 = vsub.s32 0, %v36
    %v38 = vrot.slane %v18, %v37
    %v39 = vmul.f32 %v33, %v38
    %v40 = vlaneseq
    %v41 = vshrl.u32 %v40, 7
    %v42 = vsub.s32 1, %v41
    %v43 = vrot.slane %v18, %v42
    %v44 = vadd.f32 %v39, %v43
    %v45 = vmax.f32 %v44, 0.0
    %v46 = vlaneseq
    %v47 = vshrl.u32 %v46, 7
    %v48 = vsub.s32 0, %v47
    %v49 = vrot.slane %v23, %v48
    %vm50 = vcmask 261120
    %v52 = vsel %vm50, %v45, 0
    %54 = vmatprep.subr.mxu0 0.0
    %55 = vmatpush1.msra.mxu0 %v19
    %56 = vmatprep.subr.mxu0 0.0
    %57 = vmatpush1.msra.mxu0 %v20
    %58 = vmatprep.subr.mxu0 0.0
    %59 = vmatpush1.msra.mxu0 %v21
    %60 = vmatprep.subr.mxu0 0.0
    %61 = vmatpush1.msra.mxu0 %v22
    %62 = vmatprep.subr.mxu0 0.0
    %63 = vmatpush1.msra.mxu0 0.0
    %64 = vmatprep.subr.mxu0 0.0
    %65 = vmatpush1.msra.mxu0 0.0
    %66 = vmatprep.subr.mxu0 0.0
    %67 = vmatpush1.msra.mxu0 0.0
    %68 = vmatprep.subr.mxu0 0.0
    %69 = vmatpush1.msra.mxu0 0.0
    %70 = vmatprep.subr.mxu0 0.0
    %71 = vmatpush1.msra.mxu0 0.0
    %72 = vmatprep.subr.mxu0 0.0
    %73 = vmatpush1.msra.mxu0 0.0
    %74 = vmatprep.subr.mxu0 0.0
    %75 = vmatpush1.msra.mxu0 0.0
    %76 = vmatprep.subr.mxu0 0.0
    %77 = vmatpush1.msra.mxu0 0.0
    %78 = vmatprep.subr.mxu0 0.0
    %79 = vmatpush1.msra.mxu0 0.0
    %80 = vmatprep.subr.mxu0 0.0
    %81 = vmatpush1.msra.mxu0 0.0
    %82 = vmatprep.subr.mxu0 0.0
    %83 = vmatpush1.msra.mxu0 0.0
    %84 = vmatprep.subr.mxu0 0.0
    %85 = vmatpush1.msra.mxu0 0.0
    %86 = vmatprep.subr.mxu0 0.0
    %87 = vmatpush1.msra.mxu0 0.0
    %88 = vmatprep.subr.mxu0 0.0
    %89 = vmatpush1.msra.mxu0 0.0
    %90 = vmatprep.subr.mxu0 0.0
    %91 = vmatpush1.msra.mxu0 0.0
    %92 = vmatprep.subr.mxu0 0.0
    %93 = vmatpush1.msra.mxu0 0.0
    %94 = vmatprep.subr.mxu0 0.0
    %95 = vmatpush1.msra.mxu0 0.0
    %96 = vmatprep.subr.mxu0 0.0
    %97 = vmatpush1.msra.mxu0 0.0
    %98 = vmatprep.subr.mxu0 0.0
    %99 = vmatpush1.msra.mxu0 0.0
    %100 = vmatprep.subr.mxu0 0.0
    %101 = vmatpush1.msra.mxu0 0.0
    %102 = vmatprep.subr.mxu0 0.0
    %103 = vmatpush1.msra.mxu0 0.0
    %104 = vmatprep.subr.mxu0 0.0
    %105 = vmatpush1.msra.mxu0 0.0
    %106 = vmatprep.subr.mxu0 0.0
    %107 = vmatpush1.msra.mxu0 0.0
    %108 = vmatprep.subr.mxu0 0.0
    %109 = vmatpush1.msra.mxu0 0.0
    %110 = vmatprep.subr.mxu0 0.0
    %111 = vmatpush1.msra.mxu0 0.0
    %112 = vmatprep.subr.mxu0 0.0
    %113 = vmatpush1.msra.mxu0 0.0
    %114 = vmatprep.subr.mxu0 0.0
    %115 = vmatpush1.msra.mxu0 0.0
    %116 = vmatprep.subr.mxu0 0.0
    %117 = vmatpush1.msra.mxu0 0.0
    %118 = vmatprep.mubr.f32.mxu0 0.0
    %119 = vmatmul.mubr.f32.gmra.mrb[0].mxu0 %v52
    %v120 = vpop.f32.mrb[0].mxu0
    %v121 = vadd.f32 %v49, %v120
    %v122 = vpop.f32.mrb[0].mxu0
    %123 = vdwg.mxu0
    %v124 = vmax.f32 %v121, 0.0
    %v125 = vlaneseq
    %v126 = vshrl.u32 %v125, 7
    %v127 = vsub.s32 0, %v126
    %v128 = vrot.slane %v28, %v127
    %v130 = vsel %vm50, %v124, 0
    %132 = vmatprep.subr.mxu0 0.0
    %133 = vmatpush1.msra.mxu0 %v24
    %134 = vmatprep.subr.mxu0 0.0
    %135 = vmatpush1.msra.mxu0 %v25
    %136 = vmatprep.subr.mxu0 0.0
    %137 = vmatpush1.msra.mxu0 %v26
    %138 = vmatprep.subr.mxu0 0.0
    %139 = vmatpush1.msra.mxu0 %v27
    %140 = vmatprep.subr.mxu0 0.0
    %141 = vmatpush1.msra.mxu0 0.0
    %142 = vmatprep.subr.mxu0 0.0
    %143 = vmatpush1.msra.mxu0 0.0
    %144 = vmatprep.subr.mxu0 0.0
    %145 = vmatpush1.msra.mxu0 0.0
    %146 = vmatprep.subr.mxu0 0.0
    %147 = vmatpush1.msra.mxu0 0.0
    %148 = vmatprep.subr.mxu0 0.0
    %149 = vmatpush1.msra.mxu0 0.0
    %150 = vmatprep.subr.mxu0 0.0
    %151 = vmatpush1.msra.mxu0 0.0
    %152 = vmatprep.subr.mxu0 0.0
    %153 = vmatpush1.msra.mxu0 0.0
    %154 = vmatprep.subr.mxu0 0.0
    %155 = vmatpush1.msra.mxu0 0.0
    %156 = vmatprep.subr.mxu0 0.0
    %157 = vmatpush1.msra.mxu0 0.0
    %158 = vmatprep.subr.mxu0 0.0
    %159 = vmatpush1.msra.mxu0 0.0
    %160 = vmatprep.subr.mxu0 0.0
    %161 = vmatpush1.msra.mxu0 0.0
    %162 = vmatprep.subr.mxu0 0.0
    %163 = vmatpush1.msra.mxu0 0.0
    %164 = vmatprep.subr.mxu0 0.0
    %165 = vmatpush1.msra.mxu0 0.0
    %166 = vmatprep.subr.mxu0 0.0
    %167 = vmatpush1.msra.mxu0 0.0
    %168 = vmatprep.subr.mxu0 0.0
    %169 = vmatpush1.msra.mxu0 0.0
    %170 = vmatprep.subr.mxu0 0.0
    %171 = vmatpush1.msra.mxu0 0.0
    %172 = vmatprep.subr.mxu0 0.0
    %173 = vmatpush1.msra.mxu0 0.0
    %174 = vmatprep.subr.mxu0 0.0
    %175 = vmatpush1.msra.mxu0 0.0
    %176 = vmatprep.subr.mxu0 0.0
    %177 = vmatpush1.msra.mxu0 0.0
    %178 = vmatprep.subr.mxu0 0.0
    %179 = vmatpush1.msra.mxu0 0.0
    %180 = vmatprep.subr.mxu0 0.0
    %181 = vmatpush1.msra.mxu0 0.0
    %182 = vmatprep.subr.mxu0 0.0
    %183 = vmatpush1.msra.mxu0 0.0
    %184 = vmatprep.subr.mxu0 0.0
    %185 = vmatpush1.msra.mxu0 0.0
    %186 = vmatprep.subr.mxu0 0.0
    %187 = vmatpush1.msra.mxu0 0.0
    %188 = vmatprep.subr.mxu0 0.0
    %189 = vmatpush1.msra.mxu0 0.0
    %190 = vmatprep.subr.mxu0 0.0
    %191 = vmatpush1.msra.mxu0 0.0
    %192 = vmatprep.subr.mxu0 0.0
    %193 = vmatpush1.msra.mxu0 0.0
    %194 = vmatprep.subr.mxu0 0.0
    %195 = vmatpush1.msra.mxu0 0.0
    %196 = vmatprep.mubr.f32.mxu0 0.0
    %197 = vmatmul.mubr.f32.gmra.mrb[0].mxu0 %v130
    %v198 = vpop.f32.mrb[0].mxu0
    %v199 = vadd.f32 %v128, %v198
    %v200 = vpop.f32.mrb[0].mxu0
    %201 = vdwg.mxu0
    %v202 = vmul.f32 %v199, 1.442695
    %v203 = vpow.pop %v202
    %vm204 = vcmask 64512
    %205 = vst.msk [vmem:[#allocation2] sm:$0xff] %vm204, %v199
    %207 = vrot.lane.b32.xlu0 %v199, 120
    %v208 = vpop.permute.xlu0 %207
    %210 = vst.msk [vmem:[#allocation6] sm:$0xff] %vm204, %v208
    %212 = vrot.lane.b32.xlu0 %v203, 112
    %v213 = vpop.permute.xlu0 %212
    %215 = vst.msk [vmem:[#allocation7] sm:$0xff] %vm204, %v213
    %216 = vrot.lane.b32.xlu0 %v29, 15
    %v217 = vpop.permute.xlu0 %216
    %v219 = vmul.f32 %v203, %v217
    %221 = vrot.lane.b32.xlu0 %v219, 120
    %v222 = vpop.permute.xlu0 %221
    %v224 = vadd.f32 %v199, %v222
    %226 = vrot.lane.b32.xlu0 %v224, 120
    %v227 = vpop.permute.xlu0 %226
    %229 = vst.msk [vmem:[#allocation4] sm:$0xff] %vm204, %v227
    // Predicated region
    $region10: #{discrete_encoder_forward.1} parent=1 // pred_check
      _
    $region11: #{discrete_encoder_forward.1} parent=1 // pred_check_branch
      %231 = sbr.rel (0) target = $region13
    $region12: #{discrete_encoder_forward.1} parent=1 // pred_region
      %s233 = ssub.s32 128, 128
      %234 = vsyncadd [#allocation3], %s233
      %s236 = sshll.u32 [#allocation2], 4
      %s237 = int_to_ptr.vmem [resolvable:$true] %s236
      %239 = dma.vmem_to_hbm [thread:$0]  %s237, 128, %s2, [#allocation3]
    $region13: #{discrete_encoder_forward.1} parent=1 // pred_fallthru
      _
    // Predicated region
    $region14: #{discrete_encoder_forward.1} parent=1 // pred_check
      _
    $region15: #{discrete_encoder_forward.1} parent=1 // pred_check_branch
      %241 = sbr.rel (0) target = $region17
    $region16: #{discrete_encoder_forward.1} parent=1 // pred_region
      %s243 = ssub.s32 128, 128
      %244 = vsyncadd [#allocation5], %s243
      %s246 = sshll.u32 [#allocation4], 4
      %s247 = int_to_ptr.vmem [resolvable:$true] %s246
      %249 = dma.vmem_to_hbm [thread:$0]  %s247, 128, %s3, [#allocation5]
    $region17: #{discrete_encoder_forward.1} parent=1 // pred_fallthru
      _
    // Predicated region
    $region18: #{discrete_encoder_forward.1} parent=1 // pred_check
      _
    $region19: #{discrete_encoder_forward.1} parent=1 // pred_check_branch
      %251 = sbr.rel (0) target = $region21
    $region20: #{discrete_encoder_forward.1} parent=1 // pred_region
      %s253 = ssub.s32 128, 128
      %254 = vsyncadd [#allocation5], %s253
      %s256 = sshll.u32 [#allocation6], 4
      %s257 = int_to_ptr.vmem [resolvable:$true] %s256
      %259 = dma.vmem_to_hbm [thread:$0]  %s257, 128, %s4, [#allocation5]
    $region21: #{discrete_encoder_forward.1} parent=1 // pred_fallthru
      _
    // Predicated region
    $region22: #{discrete_encoder_forward.1} parent=1 // pred_check
      _
    $region23: #{discrete_encoder_forward.1} parent=1 // pred_check_branch
      %261 = sbr.rel (0) target = $region25
    $region24: #{discrete_encoder_forward.1} parent=1 // pred_region
      %s263 = ssub.s32 128, 128
      %264 = vsyncadd [#allocation8], %s263
      %s266 = sshll.u32 [#allocation7], 4
      %s267 = int_to_ptr.vmem [resolvable:$true] %s266
      %269 = dma.vmem_to_hbm [thread:$0]  %s267, 128, %s5, [#allocation8]
    $region25: #{discrete_encoder_forward.1} parent=1 // pred_fallthru
      _
    // Predicated region
    $region26: #{discrete_encoder_forward.1} parent=1 // pred_check
      _
    $region27: #{discrete_encoder_forward.1} parent=1 // pred_check_branch
      %271 = sbr.rel (0) target = $region29
    $region28: #{discrete_encoder_forward.1} parent=1 // pred_region
      %272 = dma.done [#allocation3], 128
    $region29: #{discrete_encoder_forward.1} parent=1 // pred_fallthru
      _
    // Predicated region
    $region30: #{discrete_encoder_forward.1} parent=1 // pred_check
      _
    $region31: #{discrete_encoder_forward.1} parent=1 // pred_check_branch
      %274 = sbr.rel (0) target = $region33
    $region32: #{discrete_encoder_forward.1} parent=1 // pred_region
      %275 = dma.done [#allocation5], 128
    $region33: #{discrete_encoder_forward.1} parent=1 // pred_fallthru
      _
    // Predicated region
    $region34: #{discrete_encoder_forward.1} parent=1 // pred_check
      _
    $region35: #{discrete_encoder_forward.1} parent=1 // pred_check_branch
      %277 = sbr.rel (0) target = $region37
    $region36: #{discrete_encoder_forward.1} parent=1 // pred_region
      %278 = dma.done [#allocation5], 128
    $region37: #{discrete_encoder_forward.1} parent=1 // pred_fallthru
      _
    // Predicated region
    $region38: #{discrete_encoder_forward.1} parent=1 // pred_check
      _
    $region39: #{discrete_encoder_forward.1} parent=1 // pred_check_branch
      %280 = sbr.rel (0) target = $region41
    $region40: #{discrete_encoder_forward.1} parent=1 // pred_region
      %281 = dma.done [#allocation8], 128
    $region41: #{discrete_encoder_forward.1} parent=1 // pred_fallthru
      _
    %282 = vsyncpa [#allocation3], 1
    %283 = vsyncpa [#allocation5], 1
    %284 = vsyncpa [#allocation8], 1

</llo_original>
